<compile_context>
chip_gen: v7x
topology: tpu7x:2x2x1
jax: 0.10.0
libtpu: 0.0.40
codegen_flags: <defaults>
</compile_context>

<pallas_src>
import jax
import jax.numpy as jnp
from jax import lax
from jax.experimental import pallas as pl
from jax.experimental.pallas import tpu as pltpu


def grunet_kernel(x_ref, h0_ref, wih_t_ref, whh_t_ref, bih_ref, bhh_ref,
                  wp_t_ref, bp_ref, wv_ref, bv_ref,
                  p_out_ref, v_out_ref, h_out_ref, xg_ref):
    # x_ref:    (T*NP, CP)  time-major input, batch padded to NP, channels to CP
    # h0_ref:   (NP, Hd)    initial hidden state
    # wih_t:    (CP, 3Hd)   W_ih^T (gate order r, z, n)   whh_t: (Hd, 3Hd)
    # bih/bhh:  (1, 3Hd)    wp_t: (Hd, n_classes)  bp: (1, n_classes)
    # wv:       (1, Hd)     i2v weight as a row    bv: (1,) scalar in SMEM
    # outputs:  p (NP, n_classes), v (NP, 1), h (NP, Hd)
    # scratch:  xg_ref (T*NP, 3Hd)  precomputed input projections
    NP = h0_ref.shape[0]
    Hd = whh_t_ref.shape[0]
    T = x_ref.shape[0] // NP

    # ---- input projection for every timestep in one MXU pass -------------
    xg_ref[...] = (jnp.dot(x_ref[...], wih_t_ref[...],
                           preferred_element_type=jnp.float32) + bih_ref[...])

    whh_t = whh_t_ref[...]          # hoisted out of the recurrence
    bhh = bhh_ref[...]

    # ---- sequential GRU recurrence (carry = hidden state, (NP, Hd)) ------
    def step(t, h):
        row = pl.multiple_of(t * NP, NP)           # sublane-aligned slab
        xg = xg_ref[pl.ds(row, NP), :]             # (NP, 3Hd)
        hg = jnp.dot(h, whh_t, preferred_element_type=jnp.float32) + bhh
        r = jax.nn.sigmoid(xg[:, 0:Hd] + hg[:, 0:Hd])
        z = jax.nn.sigmoid(xg[:, Hd:2 * Hd] + hg[:, Hd:2 * Hd])
        n = jnp.tanh(xg[:, 2 * Hd:3 * Hd] + r * hg[:, 2 * Hd:3 * Hd])
        return (1.0 - z) * n + z * h

    h_last = lax.fori_loop(0, T, step, h0_ref[...])
    h_out_ref[...] = h_last

    # ---- heads on relu(out[:, -1]) == relu(h_last) ------------------------
    hr = jnp.maximum(h_last, 0.0)

    # policy head: logSoftmax(...).exp() == softmax over the class axis
    logits = (jnp.dot(hr, wp_t_ref[...], preferred_element_type=jnp.float32)
              + bp_ref[...])
    m = jnp.max(logits, axis=-1, keepdims=True)
    e = jnp.exp(logits - m)
    p_out_ref[...] = e / jnp.sum(e, axis=-1, keepdims=True)

    # value head: 1-output Linear as VPU multiply + lane reduce (no MXU pass)
    v_out_ref[...] = (jnp.sum(hr * wv_ref[...], axis=-1, keepdims=True)
                      + bv_ref[0])


def grunet_forward(x, h0, params, *, n_classes):
    """x: (N, C, H, W) f32; h0: (1, N, Hd) f32. Returns (p, v, h)."""
    wih, whh, bih, bhh, wp, bp, wv, bv = params
    N, C, Hi, Wi = x.shape
    T = Hi * Wi
    Hd = whh.shape[1]
    NP = 8   # pad batch to one sublane tile -> aligned per-step slices
    CP = 8   # pad channels -> aligned matmul contraction dim

    # Module semantics (flatten + transpose) then time-major padded layout.
    # These are tiny glue arrays; the heavy data stays lane-dense in-kernel.
    xs = jnp.transpose(x.reshape(N, C, T), (2, 0, 1))            # (T, N, C)
    x_pad = jnp.zeros((T, NP, CP), jnp.float32).at[:, :N, :C].set(xs)
    x_pad = x_pad.reshape(T * NP, CP)

    h0p = jnp.zeros((NP, Hd), jnp.float32).at[:N].set(h0[0])

    wih_t = jnp.zeros((CP, 3 * Hd), jnp.float32).at[:C].set(wih.T)
    whh_t = whh.T                                   # (Hd, 3Hd)
    bih2 = bih.reshape(1, 3 * Hd)
    bhh2 = bhh.reshape(1, 3 * Hd)
    wp_t = wp.T                                     # (Hd, n_classes)
    bp2 = bp.reshape(1, n_classes)
    wv_row = wv.reshape(1, Hd)
    bv_s = bv.reshape(1)

    vmem = pl.BlockSpec(memory_space=pltpu.MemorySpace.VMEM)
    smem = pl.BlockSpec(memory_space=pltpu.MemorySpace.SMEM)

    p_full, v_full, h_full = pl.pallas_call(
        grunet_kernel,
        out_shape=(jax.ShapeDtypeStruct((NP, n_classes), jnp.float32),
                   jax.ShapeDtypeStruct((NP, 1), jnp.float32),
                   jax.ShapeDtypeStruct((NP, Hd), jnp.float32)),
        in_specs=[vmem, vmem, vmem, vmem, vmem,      # x, h0, wih_t, whh_t, bih
                  vmem, vmem, vmem, vmem, smem],     # bhh, wp_t, bp, wv, bv
        out_specs=(vmem, vmem, vmem),
        scratch_shapes=[pltpu.VMEM((T * NP, 3 * Hd), jnp.float32)],
    )(x_pad, h0p, wih_t, whh_t, bih2, bhh2, wp_t, bp2, wv_row, bv_s)

    return p_full[:N], v_full[:N], h_full[:N][None]


def init_params(key, in_channels, n_classes, hidden):
    """Shapes match nn.GRU(in_channels, hidden) + Linear(hidden, n_classes/1)."""
    ks = jax.random.split(key, 8)
    s = 1.0 / jnp.sqrt(jnp.float32(hidden))
    wih = jax.random.uniform(ks[0], (3 * hidden, in_channels), jnp.float32, -s, s)
    whh = jax.random.uniform(ks[1], (3 * hidden, hidden), jnp.float32, -s, s)
    bih = jax.random.uniform(ks[2], (3 * hidden,), jnp.float32, -s, s)
    bhh = jax.random.uniform(ks[3], (3 * hidden,), jnp.float32, -s, s)
    wp = jax.random.uniform(ks[4], (n_classes, hidden), jnp.float32, -s, s)
    bp = jax.random.uniform(ks[5], (n_classes,), jnp.float32, -s, s)
    wv = jax.random.uniform(ks[6], (1, hidden), jnp.float32, -s, s)
    bv = jax.random.uniform(ks[7], (1,), jnp.float32, -s, s)
    return (wih, whh, bih, bhh, wp, bp, wv, bv)


def grunet_reference(x, h0, params):
    """Pure-JAX reference mirroring the PyTorch forward."""
    wih, whh, bih, bhh, wp, bp, wv, bv = params
    N, C, Hi, Wi = x.shape
    T = Hi * Wi
    Hd = whh.shape[1]
    hi = jax.lax.Precision.HIGHEST
    xs = jnp.transpose(x.reshape(N, C, T), (0, 2, 1))            # (N, T, C)

    def step(h, xt):
        gi = jnp.dot(xt, wih.T, precision=hi) + bih
        gh = jnp.dot(h, whh.T, precision=hi) + bhh
        r = jax.nn.sigmoid(gi[:, :Hd] + gh[:, :Hd])
        z = jax.nn.sigmoid(gi[:, Hd:2 * Hd] + gh[:, Hd:2 * Hd])
        n = jnp.tanh(gi[:, 2 * Hd:] + r * gh[:, 2 * Hd:])
        return (1.0 - z) * n + z * h, None

    h_last, _ = lax.scan(step, h0[0], jnp.swapaxes(xs, 0, 1))
    hr = jnp.maximum(h_last, 0.0)
    logits = jnp.dot(hr, wp.T, precision=hi) + bp
    p = jnp.exp(jax.nn.log_softmax(logits, axis=1))
    v = jnp.dot(hr, wv.T, precision=hi) + bv
    return p, v, h_last[None]


if __name__ == "__main__":
    # Small shapes consistent with the module: batch=2, in_channels=4,
    # spatial 8x8 -> seq length T=64, hidden=32, n_classes=8.
    N, C, S = 2, 4, 8
    n_classes, hidden = 8, 32

    key = jax.random.PRNGKey(0)
    kx, kh, kp = jax.random.split(key, 3)
    x = jax.random.normal(kx, (N, C, S, S), jnp.float32)
    h0 = 0.1 * jax.random.normal(kh, (1, N, hidden), jnp.float32)
    params = init_params(kp, C, n_classes, hidden)

    p, v, h = grunet_forward(x, h0, params, n_classes=n_classes)
    p, v, h = jax.block_until_ready((p, v, h))

    p_ref, v_ref, h_ref = grunet_reference(x, h0, params)
    assert p.shape == (N, n_classes) and v.shape == (N, 1) and h.shape == (1, N, hidden)
    # 1e-3 tolerance covers MXU f32 multi-pass rounding over the T-step recurrence.
    assert jnp.allclose(p, p_ref, atol=1e-3, rtol=1e-3), (p, p_ref)
    assert jnp.allclose(v, v_ref, atol=1e-3, rtol=1e-3), (v, v_ref)
    assert jnp.allclose(h, h_ref, atol=1e-3, rtol=1e-3), (h, h_ref)

    print("KERNEL_OK")
</pallas_src>

<mosaic_0001>
module attributes {stable_mosaic.version = 11 : i64} {
  func.func @grunet_kernel(%arg0: memref<512x8xf32, #tpu.memory_space<vmem>>, %arg1: memref<8x32xf32, #tpu.memory_space<vmem>>, %arg2: memref<8x96xf32, #tpu.memory_space<vmem>>, %arg3: memref<32x96xf32, #tpu.memory_space<vmem>>, %arg4: memref<1x96xf32, #tpu.memory_space<vmem>>, %arg5: memref<1x96xf32, #tpu.memory_space<vmem>>, %arg6: memref<32x8xf32, #tpu.memory_space<vmem>>, %arg7: memref<1x8xf32, #tpu.memory_space<vmem>>, %arg8: memref<1x32xf32, #tpu.memory_space<vmem>>, %arg9: memref<1xf32, #tpu.memory_space<smem>>, %arg10: memref<8x8xf32, #tpu.memory_space<vmem>>, %arg11: memref<8x1xf32, #tpu.memory_space<vmem>>, %arg12: memref<8x32xf32, #tpu.memory_space<vmem>>, %arg13: memref<512x96xf32, #tpu.memory_space<vmem>>) attributes {dimension_semantics = [], scalar_prefetch = 0 : i64, scratch_operands = 1 : i64, tpu.core_type = #tpu.core_type<tc>} {
    %c0 = arith.constant 0 : index
    %c0_0 = arith.constant 0 : index
    %0 = vector.load %arg0[%c0, %c0_0] : memref<512x8xf32, #tpu.memory_space<vmem>>, vector<512x8xf32>
    %c0_1 = arith.constant 0 : index
    %c0_2 = arith.constant 0 : index
    %1 = vector.load %arg2[%c0_1, %c0_2] : memref<8x96xf32, #tpu.memory_space<vmem>>, vector<8x96xf32>
    %cst = arith.constant dense<0.000000e+00> : vector<512x96xf32>
    %2 = tpu.matmul %0, %1, %cst {dimension_numbers = #tpu.dot_dimension_numbers<[1], [0], [0], [1], [0, 0, 1, 1], [], []>} : vector<512x8xf32>, vector<8x96xf32>, vector<512x96xf32> -> vector<512x96xf32>
    %c0_3 = arith.constant 0 : index
    %c0_4 = arith.constant 0 : index
    %3 = vector.load %arg4[%c0_3, %c0_4] : memref<1x96xf32, #tpu.memory_space<vmem>>, vector<1x96xf32>
    %4 = vector.broadcast %3 : vector<1x96xf32> to vector<512x96xf32>
    %5 = arith.addf %2, %4 : vector<512x96xf32>
    %c0_5 = arith.constant 0 : index
    %c0_6 = arith.constant 0 : index
    %6 = vector.load %arg13[%c0_5, %c0_6] : memref<512x96xf32, #tpu.memory_space<vmem>>, vector<512x96xf32>
    tpu.vector_store %arg13[%c0_5, %c0_6], %5 {strides = array<i32>} : memref<512x96xf32, #tpu.memory_space<vmem>>, vector<512x96xf32>,
    %c0_7 = arith.constant 0 : index
    %c0_8 = arith.constant 0 : index
    %7 = vector.load %arg3[%c0_7, %c0_8] : memref<32x96xf32, #tpu.memory_space<vmem>>, vector<32x96xf32>
    %c0_9 = arith.constant 0 : index
    %c0_10 = arith.constant 0 : index
    %8 = vector.load %arg5[%c0_9, %c0_10] : memref<1x96xf32, #tpu.memory_space<vmem>>, vector<1x96xf32>
    %c0_11 = arith.constant 0 : index
    %c0_12 = arith.constant 0 : index
    %9 = vector.load %arg1[%c0_11, %c0_12] : memref<8x32xf32, #tpu.memory_space<vmem>>, vector<8x32xf32>
    %c0_i32 = arith.constant 0 : i32
    %c64_i32 = arith.constant 64 : i32
    %10 = arith.addi %c0_i32, %c64_i32 : i32
    %c1_i32 = arith.constant 1 : i32
    %11 = scf.for %arg14 = %c0_i32 to %10 step %c1_i32 iter_args(%arg15 = %9) -> (vector<8x32xf32>)  : i32 {
      %c8_i32 = arith.constant 8 : i32
      %39 = arith.muli %arg14, %c8_i32 : i32
      %40 = tpu.assume_multiple %39, 8 : i32
      %41 = arith.index_cast %40 : i32 to index
      %c0_32 = arith.constant 0 : index
      %42 = vector.load %arg13[%41, %c0_32] : memref<512x96xf32, #tpu.memory_space<vmem>>, vector<8x96xf32>
      %cst_33 = arith.constant dense<0.000000e+00> : vector<8x96xf32>
      %43 = tpu.matmul %arg15, %7, %cst_33 {dimension_numbers = #tpu.dot_dimension_numbers<[1], [0], [0], [1], [0, 0, 1, 1], [], []>} : vector<8x32xf32>, vector<32x96xf32>, vector<8x96xf32> -> vector<8x96xf32>
      %44 = vector.broadcast %8 : vector<1x96xf32> to vector<8x96xf32>
      %45 = arith.addf %43, %44 : vector<8x96xf32>
      %46 = vector.extract_strided_slice %42 {offsets = [0, 0], sizes = [8, 32], strides = [1, 1]} : vector<8x96xf32> to vector<8x32xf32>
      %47 = vector.extract_strided_slice %45 {offsets = [0, 0], sizes = [8, 32], strides = [1, 1]} : vector<8x96xf32> to vector<8x32xf32>
      %48 = arith.addf %46, %47 : vector<8x32xf32>
      %49 = arith.negf %48 : vector<8x32xf32>
      %50 = math.exp %49 : vector<8x32xf32>
      %cst_34 = arith.constant 1.000000e+00 : f32
      %51 = vector.broadcast %cst_34 : f32 to vector<8x32xf32>
      %52 = arith.addf %51, %50 : vector<8x32xf32>
      %53 = arith.divf %51, %52 : vector<8x32xf32>
      %54 = vector.extract_strided_slice %42 {offsets = [0, 32], sizes = [8, 32], strides = [1, 1]} : vector<8x96xf32> to vector<8x32xf32>
      %55 = vector.extract_strided_slice %45 {offsets = [0, 32], sizes = [8, 32], strides = [1, 1]} : vector<8x96xf32> to vector<8x32xf32>
      %56 = arith.addf %54, %55 : vector<8x32xf32>
      %57 = arith.negf %56 : vector<8x32xf32>
      %58 = math.exp %57 : vector<8x32xf32>
      %cst_35 = arith.constant 1.000000e+00 : f32
      %59 = vector.broadcast %cst_35 : f32 to vector<8x32xf32>
      %60 = arith.addf %59, %58 : vector<8x32xf32>
      %61 = arith.divf %59, %60 : vector<8x32xf32>
      %62 = vector.extract_strided_slice %42 {offsets = [0, 64], sizes = [8, 32], strides = [1, 1]} : vector<8x96xf32> to vector<8x32xf32>
      %63 = vector.extract_strided_slice %45 {offsets = [0, 64], sizes = [8, 32], strides = [1, 1]} : vector<8x96xf32> to vector<8x32xf32>
      %64 = arith.mulf %53, %63 : vector<8x32xf32>
      %65 = arith.addf %62, %64 : vector<8x32xf32>
      %66 = math.tanh %65 : vector<8x32xf32>
      %cst_36 = arith.constant 1.000000e+00 : f32
      %67 = vector.broadcast %cst_36 : f32 to vector<8x32xf32>
      %68 = arith.subf %67, %61 : vector<8x32xf32>
      %69 = arith.mulf %68, %66 : vector<8x32xf32>
      %70 = arith.mulf %61, %arg15 : vector<8x32xf32>
      %71 = arith.addf %69, %70 : vector<8x32xf32>
      scf.yield %71 : vector<8x32xf32>
    }
    %c64_i32_13 = arith.constant 64 : i32
    %c0_14 = arith.constant 0 : index
    %c0_15 = arith.constant 0 : index
    %12 = vector.load %arg12[%c0_14, %c0_15] : memref<8x32xf32, #tpu.memory_space<vmem>>, vector<8x32xf32>
    tpu.vector_store %arg12[%c0_14, %c0_15], %11 {strides = array<i32>} : memref<8x32xf32, #tpu.memory_space<vmem>>, vector<8x32xf32>,
    %cst_16 = arith.constant 0.000000e+00 : f32
    %13 = vector.broadcast %cst_16 : f32 to vector<8x32xf32>
    %14 = arith.maximumf %11, %13 : vector<8x32xf32>
    %c0_17 = arith.constant 0 : index
    %c0_18 = arith.constant 0 : index
    %15 = vector.load %arg6[%c0_17, %c0_18] : memref<32x8xf32, #tpu.memory_space<vmem>>, vector<32x8xf32>
    %cst_19 = arith.constant dense<0.000000e+00> : vector<8x8xf32>
    %16 = tpu.matmul %14, %15, %cst_19 {dimension_numbers = #tpu.dot_dimension_numbers<[1], [0], [0], [1], [0, 0, 1, 1], [], []>} : vector<8x32xf32>, vector<32x8xf32>, vector<8x8xf32> -> vector<8x8xf32>
    %c0_20 = arith.constant 0 : index
    %c0_21 = arith.constant 0 : index
    %17 = vector.load %arg7[%c0_20, %c0_21] : memref<1x8xf32, #tpu.memory_space<vmem>>, vector<1x8xf32>
    %18 = vector.broadcast %17 : vector<1x8xf32> to vector<8x8xf32>
    %19 = arith.addf %16, %18 : vector<8x8xf32>
    %cst_22 = arith.constant dense<0xFF800000> : vector<8xf32>
    %20 = vector.multi_reduction <maximumf>, %19, %cst_22 [1] : vector<8x8xf32> to vector<8xf32>
    %21 = vector.shape_cast %20 : vector<8xf32> to vector<8x1xf32>
    %22 = vector.broadcast %21 : vector<8x1xf32> to vector<8x8xf32>
    %23 = arith.subf %19, %22 : vector<8x8xf32>
    %24 = math.exp %23 : vector<8x8xf32>
    %cst_23 = arith.constant dense<0.000000e+00> : vector<8xf32>
    %25 = vector.multi_reduction <add>, %24, %cst_23 [1] : vector<8x8xf32> to vector<8xf32>
    %26 = vector.shape_cast %25 : vector<8xf32> to vector<8x1xf32>
    %27 = vector.broadcast %26 : vector<8x1xf32> to vector<8x8xf32>
    %28 = arith.divf %24, %27 : vector<8x8xf32>
    %c0_24 = arith.constant 0 : index
    %c0_25 = arith.constant 0 : index
    %29 = vector.load %arg10[%c0_24, %c0_25] : memref<8x8xf32, #tpu.memory_space<vmem>>, vector<8x8xf32>
    tpu.vector_store %arg10[%c0_24, %c0_25], %28 {strides = array<i32>} : memref<8x8xf32, #tpu.memory_space<vmem>>, vector<8x8xf32>,
    %c0_26 = arith.constant 0 : index
    %c0_27 = arith.constant 0 : index
    %30 = vector.load %arg8[%c0_26, %c0_27] : memref<1x32xf32, #tpu.memory_space<vmem>>, vector<1x32xf32>
    %31 = vector.broadcast %30 : vector<1x32xf32> to vector<8x32xf32>
    %32 = arith.mulf %14, %31 : vector<8x32xf32>
    %cst_28 = arith.constant dense<0.000000e+00> : vector<8xf32>
    %33 = vector.multi_reduction <add>, %32, %cst_28 [1] : vector<8x32xf32> to vector<8xf32>
    %34 = vector.shape_cast %33 : vector<8xf32> to vector<8x1xf32>
    %c0_29 = arith.constant 0 : index
    %35 = memref.load %arg9[%c0_29] : memref<1xf32, #tpu.memory_space<smem>>
    %36 = vector.broadcast %35 : f32 to vector<8x1xf32>
    %37 = arith.addf %34, %36 : vector<8x1xf32>
    %c0_30 = arith.constant 0 : index
    %c0_31 = arith.constant 0 : index
    %38 = vector.load %arg11[%c0_30, %c0_31] : memref<8x1xf32, #tpu.memory_space<vmem>>, vector<8x1xf32>
    tpu.vector_store %arg11[%c0_30, %c0_31], %37 {strides = array<i32>} : memref<8x1xf32, #tpu.memory_space<vmem>>, vector<8x1xf32>,
    return
  }
}

</mosaic_0001>

<llo_original>
// kernel: tpu_custom_call.1
$region0: #{tpu_custom_call.1}
  #allocation0 [shape = 'u32[]', space=smem, size = 0x4, offset = 0x4, fixed_abs, tag = 'smem constant byte address 0x4 - core index']
  #allocation1 [shape = 'u32[144,128]{1,0:T(1,128)}', space=vmem, size = 0x12000, scoped, tag = 'internal scratch']
  #allocation2 [shape = 'f32[512,96]{1,0:T(8,128)}', space=vmem, size = 0x40000, scoped, tag = 'scratch operand']
  #allocation3 [shape = 'f32[1]{0:T(128)S(6)}', space=smem, size = 0x200, scoped, tag = 'scoped memory for tpu_custom_call.1']
  %s0 = inlined_call_operand.vmem [shape: f32[512,8], index: 0, kind: input, shape index: {}]
  %s1 = inlined_call_operand.vmem [shape: f32[8,32], index: 1, kind: input, shape index: {}]
  %s2 = inlined_call_operand.vmem [shape: f32[8,96], index: 2, kind: input, shape index: {}]
  %s3 = inlined_call_operand.vmem [shape: f32[32,96], index: 3, kind: input, shape index: {}]
  %s4 = inlined_call_operand.vmem [shape: f32[1,96], index: 4, kind: input, shape index: {}]
  %s5 = inlined_call_operand.vmem [shape: f32[1,96], index: 5, kind: input, shape index: {}]
  %s6 = inlined_call_operand.vmem [shape: f32[32,8], index: 6, kind: input, shape index: {}]
  %s7 = inlined_call_operand.vmem [shape: f32[1,8], index: 7, kind: input, shape index: {}]
  %s8 = inlined_call_operand.vmem [shape: f32[1,32], index: 8, kind: input, shape index: {}]
  %s9 = inlined_call_operand.<no memory space> [shape: f32[1], index: 9, kind: input, shape index: {}]
  %s10 = inlined_call_operand.hbm [shape: f32[8,8], index: 10, kind: output, shape index: {0}]
  %s11 = inlined_call_operand.vmem [shape: f32[8,1], index: 11, kind: output, shape index: {1}]
  %s12 = inlined_call_operand.hbm [shape: f32[8,32], index: 12, kind: output, shape index: {2}]
  %13 = xla_tuple %s10, %s11, %s12
  %s14 = sld [smem:[#allocation0]]
  $region73: #{tpu_custom_call.1} parent=0
    _
  %s16 = ssub.s32 1, %s14
  %s17 = scalar_select 0, %s16, %s14
  %18 = sst [smem:[#allocation3]] %s9
  $region1: #{tpu_custom_call.1} parent=0
    #allocation4 [shape = 'u8[4096]{0}', space=vmem, size = 0x1000, scoped, tag = 'output window, operand 0, single buffered']
    #allocation5 [shape = 's32[1]{0}', space=sflag, size = 0x4, scoped, tag = 'scoped memory for tpu_custom_call.1']
    #allocation6 [shape = 'u8[4096]{0}', space=vmem, size = 0x1000, scoped, tag = 'output window, operand 2, single buffered']
    #allocation7 [shape = 's32[1]{0}', space=sflag, size = 0x4, scoped, tag = 'scoped memory for tpu_custom_call.1']
    %19 = vsyncpa [#allocation5], 0
    %20 = vsyncpa [#allocation7], 0
    // Predicated region
    $region2: #{tpu_custom_call.1} parent=1 // pred_check
      _
    $region3: #{tpu_custom_call.1} parent=1 // pred_check_branch
      %22 = sbr.rel (0) target = $region5
    $region4: #{tpu_custom_call.1} parent=1 // pred_region
      _
    $region5: #{tpu_custom_call.1} parent=1 // pred_fallthru
      _
    // Predicated region
    $region6: #{tpu_custom_call.1} parent=1 // pred_check
      _
    $region7: #{tpu_custom_call.1} parent=1 // pred_check_branch
      %24 = sbr.rel (0) target = $region9
    $region8: #{tpu_custom_call.1} parent=1 // pred_region
      _
    $region9: #{tpu_custom_call.1} parent=1 // pred_fallthru
      _
    // Predicated region
    $region10: #{tpu_custom_call.1} parent=1 // pred_check
      _
    $region11: #{tpu_custom_call.1} parent=1 // pred_check_branch
      %26 = sbr.rel (0) target = $region13
    $region12: #{tpu_custom_call.1} parent=1 // pred_region
      _
    $region13: #{tpu_custom_call.1} parent=1 // pred_fallthru
      _
    // Predicated region
    $region14: #{tpu_custom_call.1} parent=1 // pred_check
      _
    $region15: #{tpu_custom_call.1} parent=1 // pred_check_branch
      %28 = sbr.rel (0) target = $region17
    $region16: #{tpu_custom_call.1} parent=1 // pred_region
      _
    $region17: #{tpu_custom_call.1} parent=1 // pred_fallthru
      _
    // Predicated region
    $region18: #{tpu_custom_call.1} parent=1 // pred_check
      _
    $region19: #{tpu_custom_call.1} parent=1 // pred_check_branch
      %30 = sbr.rel (0) target = $region21
    $region20: #{tpu_custom_call.1} parent=1 // pred_region
      _
    $region21: #{tpu_custom_call.1} parent=1 // pred_fallthru
      _
    // Predicated region
    $region22: #{tpu_custom_call.1} parent=1 // pred_check
      _
    $region23: #{tpu_custom_call.1} parent=1 // pred_check_branch
      %32 = sbr.rel (0) target = $region25
    $region24: #{tpu_custom_call.1} parent=1 // pred_region
      _
    $region25: #{tpu_custom_call.1} parent=1 // pred_fallthru
      _
    // Predicated region
    $region26: #{tpu_custom_call.1} parent=1 // pred_check
      _
    $region27: #{tpu_custom_call.1} parent=1 // pred_check_branch
      %34 = sbr.rel (0) target = $region29
    $region28: #{tpu_custom_call.1} parent=1 // pred_region
      _
    $region29: #{tpu_custom_call.1} parent=1 // pred_fallthru
      _
    // Predicated region
    $region30: #{tpu_custom_call.1} parent=1 // pred_check
      _
    $region31: #{tpu_custom_call.1} parent=1 // pred_check_branch
      %36 = sbr.rel (0) target = $region33
    $region32: #{tpu_custom_call.1} parent=1 // pred_region
      _
    $region33: #{tpu_custom_call.1} parent=1 // pred_fallthru
      _
    // Predicated region
    $region34: #{tpu_custom_call.1} parent=1 // pred_check
      _
    $region35: #{tpu_custom_call.1} parent=1 // pred_check_branch
      %38 = sbr.rel (0) target = $region37
    $region36: #{tpu_custom_call.1} parent=1 // pred_region
      _
    $region37: #{tpu_custom_call.1} parent=1 // pred_fallthru
      _
    // Predicated region
    $region38: #{tpu_custom_call.1} parent=1 // pred_check
      _
    $region39: #{tpu_custom_call.1} parent=1 // pred_check_branch
      %40 = sbr.rel (0) target = $region41
    $region40: #{tpu_custom_call.1} parent=1 // pred_region
      _
    $region41: #{tpu_custom_call.1} parent=1 // pred_fallthru
      _
    %v41 = vld [vmem:[%s0] sm:$0xff]
    %v42 = vld [vmem:[%s0 + $0x8] sm:$0xff]
    %v43 = vld [vmem:[%s0 + $0x10] sm:$0xff]
    %v44 = vld [vmem:[%s0 + $0x18] sm:$0xff]
    %v45 = vld [vmem:[%s0 + $0x20] sm:$0xff]
    %v46 = vld [vmem:[%s0 + $0x28] sm:$0xff]
    %v47 = vld [vmem:[%s0 + $0x30] sm:$0xff]
    %v48 = vld [vmem:[%s0 + $0x38] sm:$0xff]
    %v49 = vld [vmem:[%s0 + $0x40] sm:$0xff]
    %v50 = vld [vmem:[%s0 + $0x48] sm:$0xff]
    %v51 = vld [vmem:[%s0 + $0x50] sm:$0xff]
    %v52 = vld [vmem:[%s0 + $0x58] sm:$0xff]
    %v53 = vld [vmem:[%s0 + $0x60] sm:$0xff]
    %v54 = vld [vmem:[%s0 + $0x68] sm:$0xff]
    %v55 = vld [vmem:[%s0 + $0x70] sm:$0xff]
    %v56 = vld [vmem:[%s0 + $0x78] sm:$0xff]
    %v57 = vld [vmem:[%s0 + $0x80] sm:$0xff]
    %v58 = vld [vmem:[%s0 + $0x88] sm:$0xff]
    %v59 = vld [vmem:[%s0 + $0x90] sm:$0xff]
    %v60 = vld [vmem:[%s0 + $0x98] sm:$0xff]
    %v61 = vld [vmem:[%s0 + $0xa0] sm:$0xff]
    %v62 = vld [vmem:[%s0 + $0xa8] sm:$0xff]
    %v63 = vld [vmem:[%s0 + $0xb0] sm:$0xff]
    %v64 = vld [vmem:[%s0 + $0xb8] sm:$0xff]
    %v65 = vld [vmem:[%s0 + $0xc0] sm:$0xff]
    %v66 = vld [vmem:[%s0 + $0xc8] sm:$0xff]
    %v67 = vld [vmem:[%s0 + $0xd0] sm:$0xff]
    %v68 = vld [vmem:[%s0 + $0xd8] sm:$0xff]
    %v69 = vld [vmem:[%s0 + $0xe0] sm:$0xff]
    %v70 = vld [vmem:[%s0 + $0xe8] sm:$0xff]
    %v71 = vld [vmem:[%s0 + $0xf0] sm:$0xff]
    %v72 = vld [vmem:[%s0 + $0xf8] sm:$0xff]
    %v73 = vld [vmem:[%s0 + $0x100] sm:$0xff]
    %v74 = vld [vmem:[%s0 + $0x108] sm:$0xff]
    %v75 = vld [vmem:[%s0 + $0x110] sm:$0xff]
    %v76 = vld [vmem:[%s0 + $0x118] sm:$0xff]
    %v77 = vld [vmem:[%s0 + $0x120] sm:$0xff]
    %v78 = vld [vmem:[%s0 + $0x128] sm:$0xff]
    %v79 = vld [vmem:[%s0 + $0x130] sm:$0xff]
    %v80 = vld [vmem:[%s0 + $0x138] sm:$0xff]
    %v81 = vld [vmem:[%s0 + $0x140] sm:$0xff]
    %v82 = vld [vmem:[%s0 + $0x148] sm:$0xff]
    %v83 = vld [vmem:[%s0 + $0x150] sm:$0xff]
    %v84 = vld [vmem:[%s0 + $0x158] sm:$0xff]
    %v85 = vld [vmem:[%s0 + $0x160] sm:$0xff]
    %v86 = vld [vmem:[%s0 + $0x168] sm:$0xff]
    %v87 = vld [vmem:[%s0 + $0x170] sm:$0xff]
    %v88 = vld [vmem:[%s0 + $0x178] sm:$0xff]
    %v89 = vld [vmem:[%s0 + $0x180] sm:$0xff]
    %v90 = vld [vmem:[%s0 + $0x188] sm:$0xff]
    %v91 = vld [vmem:[%s0 + $0x190] sm:$0xff]
    %v92 = vld [vmem:[%s0 + $0x198] sm:$0xff]
    %v93 = vld [vmem:[%s0 + $0x1a0] sm:$0xff]
    %v94 = vld [vmem:[%s0 + $0x1a8] sm:$0xff]
    %v95 = vld [vmem:[%s0 + $0x1b0] sm:$0xff]
    %v96 = vld [vmem:[%s0 + $0x1b8] sm:$0xff]
    %v97 = vld [vmem:[%s0 + $0x1c0] sm:$0xff]
    %v98 = vld [vmem:[%s0 + $0x1c8] sm:$0xff]
    %v99 = vld [vmem:[%s0 + $0x1d0] sm:$0xff]
    %v100 = vld [vmem:[%s0 + $0x1d8] sm:$0xff]
    %v101 = vld [vmem:[%s0 + $0x1e0] sm:$0xff]
    %v102 = vld [vmem:[%s0 + $0x1e8] sm:$0xff]
    %v103 = vld [vmem:[%s0 + $0x1f0] sm:$0xff]
    %v104 = vld [vmem:[%s0 + $0x1f8] sm:$0xff]
    %v105 = vld [vmem:[%s2] sm:$0xff]
    %v106 = vld [vmem:[%s4] sm:$0x1]
    %v108 = vlaneseq
    %v109 = vshrl.u32 %v108, 7
    %v110 = vsub.s32 0, %v109
    %v111 = vrot.slane %v106, %v110
    %vm113 = vcmask 64512
    %v115 = vsel %vm113, %v41, 0
    %v118 = vsel %vm113, %v42, 0
    %v121 = vsel %vm113, %v43, 0
    %v124 = vsel %vm113, %v44, 0
    %v127 = vsel %vm113, %v45, 0
    %v130 = vsel %vm113, %v46, 0
    %v133 = vsel %vm113, %v47, 0
    %v136 = vsel %vm113, %v48, 0
    %v139 = vsel %vm113, %v49, 0
    %v142 = vsel %vm113, %v50, 0
    %v145 = vsel %vm113, %v51, 0
    %v148 = vsel %vm113, %v52, 0
    %v151 = vsel %vm113, %v53, 0
    %v154 = vsel %vm113, %v54, 0
    %v157 = vsel %vm113, %v55, 0
    %v160 = vsel %vm113, %v56, 0
    %v163 = vsel %vm113, %v57, 0
    %v166 = vsel %vm113, %v58, 0
    %v169 = vsel %vm113, %v59, 0
    %v172 = vsel %vm113, %v60, 0
    %v175 = vsel %vm113, %v61, 0
    %v178 = vsel %vm113, %v62, 0
    %v181 = vsel %vm113, %v63, 0
    %v184 = vsel %vm113, %v64, 0
    %v187 = vsel %vm113, %v65, 0
    %v190 = vsel %vm113, %v66, 0
    %v193 = vsel %vm113, %v67, 0
    %v196 = vsel %vm113, %v68, 0
    %v199 = vsel %vm113, %v69, 0
    %v202 = vsel %vm113, %v70, 0
    %v205 = vsel %vm113, %v71, 0
    %v208 = vsel %vm113, %v72, 0
    %v211 = vsel %vm113, %v73, 0
    %v214 = vsel %vm113, %v74, 0
    %v217 = vsel %vm113, %v75, 0
    %v220 = vsel %vm113, %v76, 0
    %v223 = vsel %vm113, %v77, 0
    %v226 = vsel %vm113, %v78, 0
    %v229 = vsel %vm113, %v79, 0
    %v232 = vsel %vm113, %v80, 0
    %v235 = vsel %vm113, %v81, 0
    %v238 = vsel %vm113, %v82, 0
    %v241 = vsel %vm113, %v83, 0
    %v244 = vsel %vm113, %v84, 0
    %v247 = vsel %vm113, %v85, 0
    %v250 = vsel %vm113, %v86, 0
    %v253 = vsel %vm113, %v87, 0
    %v256 = vsel %vm113, %v88, 0
    %v259 = vsel %vm113, %v89, 0
    %v262 = vsel %vm113, %v90, 0
    %v265 = vsel %vm113, %v91, 0
    %v268 = vsel %vm113, %v92, 0
    %v271 = vsel %vm113, %v93, 0
    %v274 = vsel %vm113, %v94, 0
    %v277 = vsel %vm113, %v95, 0
    %v280 = vsel %vm113, %v96, 0
    %v283 = vsel %vm113, %v97, 0
    %v286 = vsel %vm113, %v98, 0
    %v289 = vsel %vm113, %v99, 0
    %v292 = vsel %vm113, %v100, 0
    %v295 = vsel %vm113, %v101, 0
    %v298 = vsel %vm113, %v102, 0
    %v301 = vsel %vm113, %v103, 0
    %v304 = vsel %vm113, %v104, 0
    %306 = vmatprep.subr.mxu0 0.0
    %307 = vmatpush1.msra.mxu0 %v105
    %308 = vmatprep.subr.mxu0 0.0
    %309 = vmatpush1.msra.mxu0 0.0
    %310 = vmatprep.subr.mxu0 0.0
    %311 = vmatpush1.msra.mxu0 0.0
    %312 = vmatprep.subr.mxu0 0.0
    %313 = vmatpush1.msra.mxu0 0.0
    %314 = vmatprep.subr.mxu0 0.0
    %315 = vmatpush1.msra.mxu0 0.0
    %316 = vmatprep.subr.mxu0 0.0
    %317 = vmatpush1.msra.mxu0 0.0
    %318 = vmatprep.subr.mxu0 0.0
    %319 = vmatpush1.msra.mxu0 0.0
    %320 = vmatprep.subr.mxu0 0.0
    %321 = vmatpush1.msra.mxu0 0.0
    %322 = vmatprep.subr.mxu0 0.0
    %323 = vmatpush1.msra.mxu0 0.0
    %324 = vmatprep.subr.mxu0 0.0
    %325 = vmatpush1.msra.mxu0 0.0
    %326 = vmatprep.subr.mxu0 0.0
    %327 = vmatpush1.msra.mxu0 0.0
    %328 = vmatprep.subr.mxu0 0.0
    %329 = vmatpush1.msra.mxu0 0.0
    %330 = vmatprep.subr.mxu0 0.0
    %331 = vmatpush1.msra.mxu0 0.0
    %332 = vmatprep.subr.mxu0 0.0
    %333 = vmatpush1.msra.mxu0 0.0
    %334 = vmatprep.subr.mxu0 0.0
    %335 = vmatpush1.msra.mxu0 0.0
    %336 = vmatprep.subr.mxu0 0.0
    %337 = vmatpush1.msra.mxu0 0.0
    %338 = vmatprep.subr.mxu0 0.0
    %339 = vmatpush1.msra.mxu0 0.0
    %340 = vmatprep.subr.mxu0 0.0
    %341 = vmatpush1.msra.mxu0 0.0
    %342 = vmatprep.subr.mxu0 0.0
    %343 = vmatpush1.msra.mxu0 0.0
    %344 = vmatprep.subr.mxu0 0.0
    %345 = vmatpush1.msra.mxu0 0.0
    %346 = vmatprep.subr.mxu0 0.0
    %347 = vmatpush1.msra.mxu0 0.0
    %348 = vmatprep.subr.mxu0 0.0
    %349 = vmatpush1.msra.mxu0 0.0
    %350 = vmatprep.subr.mxu0 0.0
    %351 = vmatpush1.msra.mxu0 0.0
    %352 = vmatprep.subr.mxu0 0.0
    %353 = vmatpush1.msra.mxu0 0.0
    %354 = vmatprep.subr.mxu0 0.0
    %355 = vmatpush1.msra.mxu0 0.0
    %356 = vmatprep.subr.mxu0 0.0
    %357 = vmatpush1.msra.mxu0 0.0
    %358 = vmatprep.subr.mxu0 0.0
    %359 = vmatpush1.msra.mxu0 0.0
    %360 = vmatprep.subr.mxu0 0.0
    %361 = vmatpush1.msra.mxu0 0.0
    %362 = vmatprep.subr.mxu0 0.0
    %363 = vmatpush1.msra.mxu0 0.0
    %364 = vmatprep.subr.mxu0 0.0
    %365 = vmatpush1.msra.mxu0 0.0
    %366 = vmatprep.subr.mxu0 0.0
    %367 = vmatpush1.msra.mxu0 0.0
    %368 = vmatprep.subr.mxu0 0.0
    %369 = vmatpush1.msra.mxu0 0.0
    %370 = vmatprep.mubr.f32.mxu0 0.0
    %371 = vmatmul.mubr.f32.gmra.mrb[0].mxu0 %v115
    %v372 = vpop.f32.mrb[0].mxu0
    %v373 = vadd.f32 %v111, %v372
    %v374 = vpop.f32.mrb[0].mxu0
    %375 = vmatprep.mubr.f32.mxu0 0.0
    %376 = vmatmul.mubr.f32.gmra.mrb[0].mxu0 %v118
    %v377 = vpop.f32.mrb[0].mxu0
    %v378 = vadd.f32 %v111, %v377
    %v379 = vpop.f32.mrb[0].mxu0
    %380 = vmatprep.mubr.f32.mxu0 0.0
    %381 = vmatmul.mubr.f32.gmra.mrb[0].mxu0 %v121
    %v382 = vpop.f32.mrb[0].mxu0
    %v383 = vadd.f32 %v111, %v382
    %v384 = vpop.f32.mrb[0].mxu0
    %385 = vmatprep.mubr.f32.mxu0 0.0
    %386 = vmatmul.mubr.f32.gmra.mrb[0].mxu0 %v124
    %v387 = vpop.f32.mrb[0].mxu0
    %v388 = vadd.f32 %v111, %v387
    %v389 = vpop.f32.mrb[0].mxu0
    %390 = vmatprep.mubr.f32.mxu0 0.0
    %391 = vmatmul.mubr.f32.gmra.mrb[0].mxu0 %v127
    %v392 = vpop.f32.mrb[0].mxu0
    %v393 = vadd.f32 %v111, %v392
    %v394 = vpop.f32.mrb[0].mxu0
    %395 = vmatprep.mubr.f32.mxu0 0.0
    %396 = vmatmul.mubr.f32.gmra.mrb[0].mxu0 %v130
    %v397 = vpop.f32.mrb[0].mxu0
    %v398 = vadd.f32 %v111, %v397
    %v399 = vpop.f32.mrb[0].mxu0
    %400 = vmatprep.mubr.f32.mxu0 0.0
    %401 = vmatmul.mubr.f32.gmra.mrb[0].mxu0 %v133
    %v402 = vpop.f32.mrb[0].mxu0
    %v403 = vadd.f32 %v111, %v402
    %v404 = vpop.f32.mrb[0].mxu0
    %405 = vmatprep.mubr.f32.mxu0 0.0
    %406 = vmatmul.mubr.f32.gmra.mrb[0].mxu0 %v136
    %v407 = vpop.f32.mrb[0].mxu0
    %v408 = vadd.f32 %v111, %v407
    %v409 = vpop.f32.mrb[0].mxu0
    %410 = vmatprep.mubr.f32.mxu0 0.0
    %411 = vmatmul.mubr.f32.gmra.mrb[0].mxu0 %v139
    %v412 = vpop.f32.mrb[0].mxu0
    %v413 = vadd.f32 %v111, %v412
    %v414 = vpop.f32.mrb[0].mxu0
    %415 = vmatprep.mubr.f32.mxu0 0.0
    %416 = vmatmul.mubr.f32.gmra.mrb[0].mxu0 %v142
    %v417 = vpop.f32.mrb[0].mxu0
    %v418 = vadd.f32 %v111, %v417
    %v419 = vpop.f32.mrb[0].mxu0
    %420 = vmatprep.mubr.f32.mxu0 0.0
    %421 = vmatmul.mubr.f32.gmra.mrb[0].mxu0 %v145
    %v422 = vpop.f32.mrb[0].mxu0
    %v423 = vadd.f32 %v111, %v422
    %v424 = vpop.f32.mrb[0].mxu0
    %425 = vmatprep.mubr.f32.mxu0 0.0
    %426 = vmatmul.mubr.f32.gmra.mrb[0].mxu0 %v148
    %v427 = vpop.f32.mrb[0].mxu0
    %v428 = vadd.f32 %v111, %v427
    %v429 = vpop.f32.mrb[0].mxu0
    %430 = vmatprep.mubr.f32.mxu0 0.0
    %431 = vmatmul.mubr.f32.gmra.mrb[0].mxu0 %v151
    %v432 = vpop.f32.mrb[0].mxu0
    %v433 = vadd.f32 %v111, %v432
    %v434 = vpop.f32.mrb[0].mxu0
    %435 = vmatprep.mubr.f32.mxu0 0.0
    %436 = vmatmul.mubr.f32.gmra.mrb[0].mxu0 %v154
    %v437 = vpop.f32.mrb[0].mxu0
    %v438 = vadd.f32 %v111, %v437
    %v439 = vpop.f32.mrb[0].mxu0
    %440 = vmatprep.mubr.f32.mxu0 0.0
    %441 = vmatmul.mubr.f32.gmra.mrb[0].mxu0 %v157
    %v442 = vpop.f32.mrb[0].mxu0
    %v443 = vadd.f32 %v111, %v442
    %v444 = vpop.f32.mrb[0].mxu0
    %445 = vmatprep.mubr.f32.mxu0 0.0
    %446 = vmatmul.mubr.f32.gmra.mrb[0].mxu0 %v160
    %v447 = vpop.f32.mrb[0].mxu0
    %v448 = vadd.f32 %v111, %v447
    %v449 = vpop.f32.mrb[0].mxu0
    %450 = vmatprep.mubr.f32.mxu0 0.0
    %451 = vmatmul.mubr.f32.gmra.mrb[0].mxu0 %v163
    %v452 = vpop.f32.mrb[0].mxu0
    %v453 = vadd.f32 %v111, %v452
    %v454 = vpop.f32.mrb[0].mxu0
    %455 = vmatprep.mubr.f32.mxu0 0.0
    %456 = vmatmul.mubr.f32.gmra.mrb[0].mxu0 %v166
    %v457 = vpop.f32.mrb[0].mxu0
    %v458 = vadd.f32 %v111, %v457
    %v459 = vpop.f32.mrb[0].mxu0
    %460 = vmatprep.mubr.f32.mxu0 0.0
    %461 = vmatmul.mubr.f32.gmra.mrb[0].mxu0 %v169
    %v462 = vpop.f32.mrb[0].mxu0
    %v463 = vadd.f32 %v111, %v462
    %v464 = vpop.f32.mrb[0].mxu0
    %465 = vmatprep.mubr.f32.mxu0 0.0
    %466 = vmatmul.mubr.f32.gmra.mrb[0].mxu0 %v172
    %v467 = vpop.f32.mrb[0].mxu0
    %v468 = vadd.f32 %v111, %v467
    %v469 = vpop.f32.mrb[0].mxu0
    %470 = vmatprep.mubr.f32.mxu0 0.0
    %471 = vmatmul.mubr.f32.gmra.mrb[0].mxu0 %v175
    %v472 = vpop.f32.mrb[0].mxu0
    %v473 = vadd.f32 %v111, %v472
    %v474 = vpop.f32.mrb[0].mxu0
    %475 = vmatprep.mubr.f32.mxu0 0.0
    %476 = vmatmul.mubr.f32.gmra.mrb[0].mxu0 %v178
    %v477 = vpop.f32.mrb[0].mxu0
    %v478 = vadd.f32 %v111, %v477
    %v479 = vpop.f32.mrb[0].mxu0
    %480 = vmatprep.mubr.f32.mxu0 0.0
    %481 = vmatmul.mubr.f32.gmra.mrb[0].mxu0 %v181
    %v482 = vpop.f32.mrb[0].mxu0
    %v483 = vadd.f32 %v111, %v482
    %v484 = vpop.f32.mrb[0].mxu0
    %485 = vmatprep.mubr.f32.mxu0 0.0
    %486 = vmatmul.mubr.f32.gmra.mrb[0].mxu0 %v184
    %v487 = vpop.f32.mrb[0].mxu0
    %v488 = vadd.f32 %v111, %v487
    %v489 = vpop.f32.mrb[0].mxu0
    %490 = vmatprep.mubr.f32.mxu0 0.0
    %491 = vmatmul.mubr.f32.gmra.mrb[0].mxu0 %v187
    %v492 = vpop.f32.mrb[0].mxu0
    %v493 = vadd.f32 %v111, %v492
    %v494 = vpop.f32.mrb[0].mxu0
    %495 = vmatprep.mubr.f32.mxu0 0.0
    %496 = vmatmul.mubr.f32.gmra.mrb[0].mxu0 %v190
    %v497 = vpop.f32.mrb[0].mxu0
    %v498 = vadd.f32 %v111, %v497
    %v499 = vpop.f32.mrb[0].mxu0
    %500 = vmatprep.mubr.f32.mxu0 0.0
    %501 = vmatmul.mubr.f32.gmra.mrb[0].mxu0 %v193
    %v502 = vpop.f32.mrb[0].mxu0
    %v503 = vadd.f32 %v111, %v502
    %v504 = vpop.f32.mrb[0].mxu0
    %505 = vmatprep.mubr.f32.mxu0 0.0
    %506 = vmatmul.mubr.f32.gmra.mrb[0].mxu0 %v196
    %v507 = vpop.f32.mrb[0].mxu0
    %v508 = vadd.f32 %v111, %v507
    %v509 = vpop.f32.mrb[0].mxu0
    %510 = vmatprep.mubr.f32.mxu0 0.0
    %511 = vmatmul.mubr.f32.gmra.mrb[0].mxu0 %v199
    %v512 = vpop.f32.mrb[0].mxu0
    %v513 = vadd.f32 %v111, %v512
    %v514 = vpop.f32.mrb[0].mxu0
    %515 = vmatprep.mubr.f32.mxu0 0.0
    %516 = vmatmul.mubr.f32.gmra.mrb[0].mxu0 %v202
    %v517 = vpop.f32.mrb[0].mxu0
    %v518 = vadd.f32 %v111, %v517
    %v519 = vpop.f32.mrb[0].mxu0
    %520 = vmatprep.mubr.f32.mxu0 0.0
    %521 = vmatmul.mubr.f32.gmra.mrb[0].mxu0 %v205
    %v522 = vpop.f32.mrb[0].mxu0
    %v523 = vadd.f32 %v111, %v522
    %v524 = vpop.f32.mrb[0].mxu0
    %525 = vmatprep.mubr.f32.mxu0 0.0
    %526 = vmatmul.mubr.f32.gmra.mrb[0].mxu0 %v208
    %v527 = vpop.f32.mrb[0].mxu0
    %v528 = vadd.f32 %v111, %v527
    %v529 = vpop.f32.mrb[0].mxu0
    %530 = vmatprep.mubr.f32.mxu0 0.0
    %531 = vmatmul.mubr.f32.gmra.mrb[0].mxu0 %v211
    %v532 = vpop.f32.mrb[0].mxu0
    %v533 = vadd.f32 %v111, %v532
    %v534 = vpop.f32.mrb[0].mxu0
    %535 = vmatprep.mubr.f32.mxu0 0.0
    %536 = vmatmul.mubr.f32.gmra.mrb[0].mxu0 %v214
    %v537 = vpop.f32.mrb[0].mxu0
    %v538 = vadd.f32 %v111, %v537
    %v539 = vpop.f32.mrb[0].mxu0
    %540 = vmatprep.mubr.f32.mxu0 0.0
    %541 = vmatmul.mubr.f32.gmra.mrb[0].mxu0 %v217
    %v542 = vpop.f32.mrb[0].mxu0
    %v543 = vadd.f32 %v111, %v542
    %v544 = vpop.f32.mrb[0].mxu0
    %545 = vmatprep.mubr.f32.mxu0 0.0
    %546 = vmatmul.mubr.f32.gmra.mrb[0].mxu0 %v220
    %v547 = vpop.f32.mrb[0].mxu0
    %v548 = vadd.f32 %v111, %v547
    %v549 = vpop.f32.mrb[0].mxu0
    %550 = vmatprep.mubr.f32.mxu0 0.0
    %551 = vmatmul.mubr.f32.gmra.mrb[0].mxu0 %v223
    %v552 = vpop.f32.mrb[0].mxu0
    %v553 = vadd.f32 %v111, %v552
    %v554 = vpop.f32.mrb[0].mxu0
    %555 = vmatprep.mubr.f32.mxu0 0.0
    %556 = vmatmul.mubr.f32.gmra.mrb[0].mxu0 %v226
    %v557 = vpop.f32.mrb[0].mxu0
    %v558 = vadd.f32 %v111, %v557
    %v559 = vpop.f32.mrb[0].mxu0
    %560 = vmatprep.mubr.f32.mxu0 0.0
    %561 = vmatmul.mubr.f32.gmra.mrb[0].mxu0 %v229
    %v562 = vpop.f32.mrb[0].mxu0
    %v563 = vadd.f32 %v111, %v562
    %v564 = vpop.f32.mrb[0].mxu0
    %565 = vmatprep.mubr.f32.mxu0 0.0
    %566 = vmatmul.mubr.f32.gmra.mrb[0].mxu0 %v232
    %v567 = vpop.f32.mrb[0].mxu0
    %v568 = vadd.f32 %v111, %v567
    %v569 = vpop.f32.mrb[0].mxu0
    %570 = vmatprep.mubr.f32.mxu0 0.0
    %571 = vmatmul.mubr.f32.gmra.mrb[0].mxu0 %v235
    %v572 = vpop.f32.mrb[0].mxu0
    %v573 = vadd.f32 %v111, %v572
    %v574 = vpop.f32.mrb[0].mxu0
    %575 = vmatprep.mubr.f32.mxu0 0.0
    %576 = vmatmul.mubr.f32.gmra.mrb[0].mxu0 %v238
    %v577 = vpop.f32.mrb[0].mxu0
    %v578 = vadd.f32 %v111, %v577
    %v579 = vpop.f32.mrb[0].mxu0
    %580 = vmatprep.mubr.f32.mxu0 0.0
    %581 = vmatmul.mubr.f32.gmra.mrb[0].mxu0 %v241
    %v582 = vpop.f32.mrb[0].mxu0
    %v583 = vadd.f32 %v111, %v582
    %v584 = vpop.f32.mrb[0].mxu0
    %585 = vmatprep.mubr.f32.mxu0 0.0
    %586 = vmatmul.mubr.f32.gmra.mrb[0].mxu0 %v244
    %v587 = vpop.f32.mrb[0].mxu0
    %v588 = vadd.f32 %v111, %v587
    %v589 = vpop.f32.mrb[0].mxu0
    %590 = vmatprep.mubr.f32.mxu0 0.0
    %591 = vmatmul.mubr.f32.gmra.mrb[0].mxu0 %v247
    %v592 = vpop.f32.mrb[0].mxu0
    %v593 = vadd.f32 %v111, %v592
    %v594 = vpop.f32.mrb[0].mxu0
    %595 = vmatprep.mubr.f32.mxu0 0.0
    %596 = vmatmul.mubr.f32.gmra.mrb[0].mxu0 %v250
    %v597 = vpop.f32.mrb[0].mxu0
    %v598 = vadd.f32 %v111, %v597
    %v599 = vpop.f32.mrb[0].mxu0
    %600 = vmatprep.mubr.f32.mxu0 0.0
    %601 = vmatmul.mubr.f32.gmra.mrb[0].mxu0 %v253
    %v602 = vpop.f32.mrb[0].mxu0
    %v603 = vadd.f32 %v111, %v602
    %v604 = vpop.f32.mrb[0].mxu0
    %605 = vmatprep.mubr.f32.mxu0 0.0
    %606 = vmatmul.mubr.f32.gmra.mrb[0].mxu0 %v256
    %v607 = vpop.f32.mrb[0].mxu0
    %v608 = vadd.f32 %v111, %v607
    %v609 = vpop.f32.mrb[0].mxu0
    %610 = vmatprep.mubr.f32.mxu0 0.0
    %611 = vmatmul.mubr.f32.gmra.mrb[0].mxu0 %v259
    %v612 = vpop.f32.mrb[0].mxu0
    %v613 = vadd.f32 %v111, %v612
    %v614 = vpop.f32.mrb[0].mxu0
    %615 = vmatprep.mubr.f32.mxu0 0.0
    %616 = vmatmul.mubr.f32.gmra.mrb[0].mxu0 %v262
    %v617 = vpop.f32.mrb[0].mxu0
    %v618 = vadd.f32 %v111, %v617
    %v619 = vpop.f32.mrb[0].mxu0
    %620 = vmatprep.mubr.f32.mxu0 0.0
    %621 = vmatmul.mubr.f32.gmra.mrb[0].mxu0 %v265
    %v622 = vpop.f32.mrb[0].mxu0
    %v623 = vadd.f32 %v111, %v622
    %v624 = vpop.f32.mrb[0].mxu0
    %625 = vmatprep.mubr.f32.mxu0 0.0
    %626 = vmatmul.mubr.f32.gmra.mrb[0].mxu0 %v268
    %v627 = vpop.f32.mrb[0].mxu0
    %v628 = vadd.f32 %v111, %v627
    %v629 = vpop.f32.mrb[0].mxu0
    %630 = vmatprep.mubr.f32.mxu0 0.0
    %631 = vmatmul.mubr.f32.gmra.mrb[0].mxu0 %v271
    %v632 = vpop.f32.mrb[0].mxu0
    %v633 = vadd.f32 %v111, %v632
    %v634 = vpop.f32.mrb[0].mxu0
    %635 = vmatprep.mubr.f32.mxu0 0.0
    %636 = vmatmul.mubr.f32.gmra.mrb[0].mxu0 %v274
    %v637 = vpop.f32.mrb[0].mxu0
    %v638 = vadd.f32 %v111, %v637
    %v639 = vpop.f32.mrb[0].mxu0
    %640 = vmatprep.mubr.f32.mxu0 0.0
    %641 = vmatmul.mubr.f32.gmra.mrb[0].mxu0 %v277
    %v642 = vpop.f32.mrb[0].mxu0
    %v643 = vadd.f32 %v111, %v642
    %v644 = vpop.f32.mrb[0].mxu0
    %645 = vmatprep.mubr.f32.mxu0 0.0
    %646 = vmatmul.mubr.f32.gmra.mrb[0].mxu0 %v280
    %v647 = vpop.f32.mrb[0].mxu0
    %v648 = vadd.f32 %v111, %v647
    %v649 = vpop.f32.mrb[0].mxu0
    %650 = vmatprep.mubr.f32.mxu0 0.0
    %651 = vmatmul.mubr.f32.gmra.mrb[0].mxu0 %v283
    %v652 = vpop.f32.mrb[0].mxu0
    %v653 = vadd.f32 %v111, %v652
    %v654 = vpop.f32.mrb[0].mxu0
    %655 = vmatprep.mubr.f32.mxu0 0.0
    %656 = vmatmul.mubr.f32.gmra.mrb[0].mxu0 %v286
    %v657 = vpop.f32.mrb[0].mxu0
    %v658 = vadd.f32 %v111, %v657
    %v659 = vpop.f32.mrb[0].mxu0
    %660 = vmatprep.mubr.f32.mxu0 0.0
    %661 = vmatmul.mubr.f32.gmra.mrb[0].mxu0 %v289
    %v662 = vpop.f32.mrb[0].mxu0
    %v663 = vadd.f32 %v111, %v662
    %v664 = vpop.f32.mrb[0].mxu0
    %665 = vmatprep.mubr.f32.mxu0 0.0
    %666 = vmatmul.mubr.f32.gmra.mrb[0].mxu0 %v292
    %v667 = vpop.f32.mrb[0].mxu0
    %v668 = vadd.f32 %v111, %v667
    %v669 = vpop.f32.mrb[0].mxu0
    %670 = vmatprep.mubr.f32.mxu0 0.0
    %671 = vmatmul.mubr.f32.gmra.mrb[0].mxu0 %v295
    %v672 = vpop.f32.mrb[0].mxu0
    %v673 = vadd.f32 %v111, %v672
    %v674 = vpop.f32.mrb[0].mxu0
    %675 = vmatprep.mubr.f32.mxu0 0.0
    %676 = vmatmul.mubr.f32.gmra.mrb[0].mxu0 %v298
    %v677 = vpop.f32.mrb[0].mxu0
    %v678 = vadd.f32 %v111, %v677
    %v679 = vpop.f32.mrb[0].mxu0
    %680 = vmatprep.mubr.f32.mxu0 0.0
    %681 = vmatmul.mubr.f32.gmra.mrb[0].mxu0 %v301
    %v682 = vpop.f32.mrb[0].mxu0
    %v683 = vadd.f32 %v111, %v682
    %v684 = vpop.f32.mrb[0].mxu0
    %685 = vmatprep.mubr.f32.mxu0 0.0
    %686 = vmatmul.mubr.f32.gmra.mrb[0].mxu0 %v304
    %v687 = vpop.f32.mrb[0].mxu0
    %v688 = vadd.f32 %v111, %v687
    %v689 = vpop.f32.mrb[0].mxu0
    %690 = vdwg.mxu0
    %vm691 = vcmask 785408
    %692 = vst.msk [vmem:[#allocation2] sm:$0xff] %vm691, %v373
    %693 = vst.msk [vmem:[#allocation2 + $0x8] sm:$0xff] %vm691, %v378
    %694 = vst.msk [vmem:[#allocation2 + $0x10] sm:$0xff] %vm691, %v383
    %695 = vst.msk [vmem:[#allocation2 + $0x18] sm:$0xff] %vm691, %v388
    %696 = vst.msk [vmem:[#allocation2 + $0x20] sm:$0xff] %vm691, %v393
    %697 = vst.msk [vmem:[#allocation2 + $0x28] sm:$0xff] %vm691, %v398
    %698 = vst.msk [vmem:[#allocation2 + $0x30] sm:$0xff] %vm691, %v403
    %699 = vst.msk [vmem:[#allocation2 + $0x38] sm:$0xff] %vm691, %v408
    %700 = vst.msk [vmem:[#allocation2 + $0x40] sm:$0xff] %vm691, %v413
    %701 = vst.msk [vmem:[#allocation2 + $0x48] sm:$0xff] %vm691, %v418
    %702 = vst.msk [vmem:[#allocation2 + $0x50] sm:$0xff] %vm691, %v423
    %703 = vst.msk [vmem:[#allocation2 + $0x58] sm:$0xff] %vm691, %v428
    %704 = vst.msk [vmem:[#allocation2 + $0x60] sm:$0xff] %vm691, %v433
    %705 = vst.msk [vmem:[#allocation2 + $0x68] sm:$0xff] %vm691, %v438
    %706 = vst.msk [vmem:[#allocation2 + $0x70] sm:$0xff] %vm691, %v443
    %707 = vst.msk [vmem:[#allocation2 + $0x78] sm:$0xff] %vm691, %v448
    %708 = vst.msk [vmem:[#allocation2 + $0x80] sm:$0xff] %vm691, %v453
    %709 = vst.msk [vmem:[#allocation2 + $0x88] sm:$0xff] %vm691, %v458
    %710 = vst.msk [vmem:[#allocation2 + $0x90] sm:$0xff] %vm691, %v463
    %711 = vst.msk [vmem:[#allocation2 + $0x98] sm:$0xff] %vm691, %v468
    %712 = vst.msk [vmem:[#allocation2 + $0xa0] sm:$0xff] %vm691, %v473
    %713 = vst.msk [vmem:[#allocation2 + $0xa8] sm:$0xff] %vm691, %v478
    %714 = vst.msk [vmem:[#allocation2 + $0xb0] sm:$0xff] %vm691, %v483
    %715 = vst.msk [vmem:[#allocation2 + $0xb8] sm:$0xff] %vm691, %v488
    %716 = vst.msk [vmem:[#allocation2 + $0xc0] sm:$0xff] %vm691, %v493
    %717 = vst.msk [vmem:[#allocation2 + $0xc8] sm:$0xff] %vm691, %v498
    %718 = vst.msk [vmem:[#allocation2 + $0xd0] sm:$0xff] %vm691, %v503
    %719 = vst.msk [vmem:[#allocation2 + $0xd8] sm:$0xff] %vm691, %v508
    %720 = vst.msk [vmem:[#allocation2 + $0xe0] sm:$0xff] %vm691, %v513
    %721 = vst.msk [vmem:[#allocation2 + $0xe8] sm:$0xff] %vm691, %v518
    %722 = vst.msk [vmem:[#allocation2 + $0xf0] sm:$0xff] %vm691, %v523
    %723 = vst.msk [vmem:[#allocation2 + $0xf8] sm:$0xff] %vm691, %v528
    %724 = vst.msk [vmem:[#allocation2 + $0x100] sm:$0xff] %vm691, %v533
    %725 = vst.msk [vmem:[#allocation2 + $0x108] sm:$0xff] %vm691, %v538
    %726 = vst.msk [vmem:[#allocation2 + $0x110] sm:$0xff] %vm691, %v543
    %727 = vst.msk [vmem:[#allocation2 + $0x118] sm:$0xff] %vm691, %v548
    %728 = vst.msk [vmem:[#allocation2 + $0x120] sm:$0xff] %vm691, %v553
    %729 = vst.msk [vmem:[#allocation2 + $0x128] sm:$0xff] %vm691, %v558
    %730 = vst.msk [vmem:[#allocation2 + $0x130] sm:$0xff] %vm691, %v563
    %731 = vst.msk [vmem:[#allocation2 + $0x138] sm:$0xff] %vm691, %v568
    %732 = vst.msk [vmem:[#allocation2 + $0x140] sm:$0xff] %vm691, %v573
    %733 = vst.msk [vmem:[#allocation2 + $0x148] sm:$0xff] %vm691, %v578
    %734 = vst.msk [vmem:[#allocation2 + $0x150] sm:$0xff] %vm691, %v583
    %735 = vst.msk [vmem:[#allocation2 + $0x158] sm:$0xff] %vm691, %v588
    %736 = vst.msk [vmem:[#allocation2 + $0x160] sm:$0xff] %vm691, %v593
    %737 = vst.msk [vmem:[#allocation2 + $0x168] sm:$0xff] %vm691, %v598
    %738 = vst.msk [vmem:[#allocation2 + $0x170] sm:$0xff] %vm691, %v603
    %739 = vst.msk [vmem:[#allocation2 + $0x178] sm:$0xff] %vm691, %v608
    %740 = vst.msk [vmem:[#allocation2 + $0x180] sm:$0xff] %vm691, %v613
    %741 = vst.msk [vmem:[#allocation2 + $0x188] sm:$0xff] %vm691, %v618
    %742 = vst.msk [vmem:[#allocation2 + $0x190] sm:$0xff] %vm691, %v623
    %743 = vst.msk [vmem:[#allocation2 + $0x198] sm:$0xff] %vm691, %v628
    %744 = vst.msk [vmem:[#allocation2 + $0x1a0] sm:$0xff] %vm691, %v633
    %745 = vst.msk [vmem:[#allocation2 + $0x1a8] sm:$0xff] %vm691, %v638
    %746 = vst.msk [vmem:[#allocation2 + $0x1b0] sm:$0xff] %vm691, %v643
    %747 = vst.msk [vmem:[#allocation2 + $0x1b8] sm:$0xff] %vm691, %v648
    %748 = vst.msk [vmem:[#allocation2 + $0x1c0] sm:$0xff] %vm691, %v653
    %749 = vst.msk [vmem:[#allocation2 + $0x1c8] sm:$0xff] %vm691, %v658
    %750 = vst.msk [vmem:[#allocation2 + $0x1d0] sm:$0xff] %vm691, %v663
    %751 = vst.msk [vmem:[#allocation2 + $0x1d8] sm:$0xff] %vm691, %v668
    %752 = vst.msk [vmem:[#allocation2 + $0x1e0] sm:$0xff] %vm691, %v673
    %753 = vst.msk [vmem:[#allocation2 + $0x1e8] sm:$0xff] %vm691, %v678
    %754 = vst.msk [vmem:[#allocation2 + $0x1f0] sm:$0xff] %vm691, %v683
    %755 = vst.msk [vmem:[#allocation2 + $0x1f8] sm:$0xff] %vm691, %v688
    %v756 = vld [vmem:[%s3] sm:$0xff]
    %v757 = vld [vmem:[%s3 + $0x8] sm:$0xff]
    %v758 = vld [vmem:[%s3 + $0x10] sm:$0xff]
    %v759 = vld [vmem:[%s3 + $0x18] sm:$0xff]
    %v760 = vld [vmem:[%s5] sm:$0x1]
    %v761 = vld [vmem:[%s1] sm:$0xff]
    loop: start=0, step=1, limit=64
    $region42: #{tpu_custom_call.1} parent=1 // loop_pre_header
      _
    $region43: #{tpu_custom_call.1} parent=1 // loop_header
      %s763 = sphi 0, %s767
      %p764 = scmp.ge.s32.totalorder %s763, 64
      %v768 = vphi %v761, %v883
    $region44: #{tpu_custom_call.1} parent=1 // loop_header_branch
      %766 = sbr.rel (%p764) target = $region48
    $region45: #{tpu_custom_call.1} parent=1 // loop_body
      %s769 = smul.u32 %s763, 8
      %s770 = scalar_lea.vmem [#allocation2], %s769
      %v771 = vld [vmem:[%s770] sm:$0xff]
      %v773 = vlaneseq
      %v774 = vshrl.u32 %v773, 7
      %v775 = vsub.s32 0, %v774
      %v776 = vrot.slane %v760, %v775
      %vm778 = vcmask 261120
      %v780 = vsel %vm778, %v768, 0
      %782 = vmatprep.subr.mxu0 0.0
      %783 = vmatpush1.msra.mxu0 %v756
      %784 = vmatprep.subr.mxu0 0.0
      %785 = vmatpush1.msra.mxu0 %v757
      %786 = vmatprep.subr.mxu0 0.0
      %787 = vmatpush1.msra.mxu0 %v758
      %788 = vmatprep.subr.mxu0 0.0
      %789 = vmatpush1.msra.mxu0 %v759
      %790 = vmatprep.subr.mxu0 0.0
      %791 = vmatpush1.msra.mxu0 0.0
      %792 = vmatprep.subr.mxu0 0.0
      %793 = vmatpush1.msra.mxu0 0.0
      %794 = vmatprep.subr.mxu0 0.0
      %795 = vmatpush1.msra.mxu0 0.0
      %796 = vmatprep.subr.mxu0 0.0
      %797 = vmatpush1.msra.mxu0 0.0
      %798 = vmatprep.subr.mxu0 0.0
      %799 = vmatpush1.msra.mxu0 0.0
      %800 = vmatprep.subr.mxu0 0.0
      %801 = vmatpush1.msra.mxu0 0.0
      %802 = vmatprep.subr.mxu0 0.0
      %803 = vmatpush1.msra.mxu0 0.0
      %804 = vmatprep.subr.mxu0 0.0
      %805 = vmatpush1.msra.mxu0 0.0
      %806 = vmatprep.subr.mxu0 0.0
      %807 = vmatpush1.msra.mxu0 0.0
      %808 = vmatprep.subr.mxu0 0.0
      %809 = vmatpush1.msra.mxu0 0.0
      %810 = vmatprep.subr.mxu0 0.0
      %811 = vmatpush1.msra.mxu0 0.0
      %812 = vmatprep.subr.mxu0 0.0
      %813 = vmatpush1.msra.mxu0 0.0
      %814 = vmatprep.subr.mxu0 0.0
      %815 = vmatpush1.msra.mxu0 0.0
      %816 = vmatprep.subr.mxu0 0.0
      %817 = vmatpush1.msra.mxu0 0.0
      %818 = vmatprep.subr.mxu0 0.0
      %819 = vmatpush1.msra.mxu0 0.0
      %820 = vmatprep.subr.mxu0 0.0
      %821 = vmatpush1.msra.mxu0 0.0
      %822 = vmatprep.subr.mxu0 0.0
      %823 = vmatpush1.msra.mxu0 0.0
      %824 = vmatprep.subr.mxu0 0.0
      %825 = vmatpush1.msra.mxu0 0.0
      %826 = vmatprep.subr.mxu0 0.0
      %827 = vmatpush1.msra.mxu0 0.0
      %828 = vmatprep.subr.mxu0 0.0
      %829 = vmatpush1.msra.mxu0 0.0
      %830 = vmatprep.subr.mxu0 0.0
      %831 = vmatpush1.msra.mxu0 0.0
      %832 = vmatprep.subr.mxu0 0.0
      %833 = vmatpush1.msra.mxu0 0.0
      %834 = vmatprep.subr.mxu0 0.0
      %835 = vmatpush1.msra.mxu0 0.0
      %836 = vmatprep.subr.mxu0 0.0
      %837 = vmatpush1.msra.mxu0 0.0
      %838 = vmatprep.subr.mxu0 0.0
      %839 = vmatpush1.msra.mxu0 0.0
      %840 = vmatprep.subr.mxu0 0.0
      %841 = vmatpush1.msra.mxu0 0.0
      %842 = vmatprep.subr.mxu0 0.0
      %843 = vmatpush1.msra.mxu0 0.0
      %844 = vmatprep.subr.mxu0 0.0
      %845 = vmatpush1.msra.mxu0 0.0
      %846 = vmatprep.mubr.f32.mxu0 0.0
      %847 = vmatmul.mubr.f32.gmra.mrb[0].mxu0 %v780
      %v848 = vpop.f32.mrb[0].mxu0
      %v849 = vadd.f32 %v776, %v848
      %v850 = vpop.f32.mrb[0].mxu0
      %851 = vdwg.mxu0
      %v852 = vadd.f32 %v771, %v849
      %v853 = vxor.u32 %v852, 2147483648
      %v854 = vmul.f32 %v853, 1.442695
      %v855 = vpow.pop %v854
      %v856 = vadd.f32 %v855, 1.0
      %v857 = vrcp.pop %v856
      %v858 = vmul.f32 1.0, %v857
      %860 = vrot.lane.b32.xlu0 %v849, 64
      %v861 = vpop.permute.xlu0 %860
      %v863 = vmul.f32 %v858, %v861
      %865 = vrot.lane.b32.xlu0 %v863, 64
      %v866 = vpop.permute.xlu0 %865
      %v868 = vadd.f32 %v771, %v866
      %v869 = vtanh.pop %v868
      %v870 = vsub.f32 1.0, %v858
      %872 = vrot.lane.b32.xlu0 %v869, 96
      %v873 = vpop.permute.xlu0 %872
      %v875 = vmul.f32 %v870, %v873
      %876 = vrot.lane.b32.xlu0 %v768, 32
      %v877 = vpop.permute.xlu0 %876
      %v879 = vmul.f32 %v858, %v877
      %v880 = vadd.f32 %v875, %v879
      %882 = vrot.lane.b32.xlu0 %v880, 96
      %v883 = vpop.permute.xlu0 %882
    $region46: #{tpu_custom_call.1} parent=1 // loop_footer
      %s767 = sadd.s32 1, %s763
    $region47: #{tpu_custom_call.1} parent=1 // loop_footer_branch
      %762 = sbr.rel target = $region43
    $region48: #{tpu_custom_call.1} parent=1 // loop_exit
      _
    %vm885 = vcmask 261120
    %886 = vst.msk [vmem:[#allocation6] sm:$0xff] %vm885, %v768
    %v887 = vmax.f32 %v768, 0.0
    %v888 = vld [vmem:[%s6] sm:$0xff]
    %v889 = vld [vmem:[%s6 + $0x8] sm:$0xff]
    %v890 = vld [vmem:[%s6 + $0x10] sm:$0xff]
    %v891 = vld [vmem:[%s6 + $0x18] sm:$0xff]
    %v892 = vld [vmem:[%s7] sm:$0x1]
    %v894 = vlaneseq
    %v895 = vshrl.u32 %v894, 7
    %v896 = vsub.s32 0, %v895
    %v897 = vrot.slane %v892, %v896
    %v900 = vsel %vm885, %v887, 0
    %902 = vmatprep.subr.mxu0 0.0
    %903 = vmatpush1.msra.mxu0 %v888
    %904 = vmatprep.subr.mxu0 0.0
    %905 = vmatpush1.msra.mxu0 %v889
    %906 = vmatprep.subr.mxu0 0.0
    %907 = vmatpush1.msra.mxu0 %v890
    %908 = vmatprep.subr.mxu0 0.0
    %909 = vmatpush1.msra.mxu0 %v891
    %910 = vmatprep.subr.mxu0 0.0
    %911 = vmatpush1.msra.mxu0 0.0
    %912 = vmatprep.subr.mxu0 0.0
    %913 = vmatpush1.msra.mxu0 0.0
    %914 = vmatprep.subr.mxu0 0.0
    %915 = vmatpush1.msra.mxu0 0.0
    %916 = vmatprep.subr.mxu0 0.0
    %917 = vmatpush1.msra.mxu0 0.0
    %918 = vmatprep.subr.mxu0 0.0
    %919 = vmatpush1.msra.mxu0 0.0
    %920 = vmatprep.subr.mxu0 0.0
    %921 = vmatpush1.msra.mxu0 0.0
    %922 = vmatprep.subr.mxu0 0.0
    %923 = vmatpush1.msra.mxu0 0.0
    %924 = vmatprep.subr.mxu0 0.0
    %925 = vmatpush1.msra.mxu0 0.0
    %926 = vmatprep.subr.mxu0 0.0
    %927 = vmatpush1.msra.mxu0 0.0
    %928 = vmatprep.subr.mxu0 0.0
    %929 = vmatpush1.msra.mxu0 0.0
    %930 = vmatprep.subr.mxu0 0.0
    %931 = vmatpush1.msra.mxu0 0.0
    %932 = vmatprep.subr.mxu0 0.0
    %933 = vmatpush1.msra.mxu0 0.0
    %934 = vmatprep.subr.mxu0 0.0
    %935 = vmatpush1.msra.mxu0 0.0
    %936 = vmatprep.subr.mxu0 0.0
    %937 = vmatpush1.msra.mxu0 0.0
    %938 = vmatprep.subr.mxu0 0.0
    %939 = vmatpush1.msra.mxu0 0.0
    %940 = vmatprep.subr.mxu0 0.0
    %941 = vmatpush1.msra.mxu0 0.0
    %942 = vmatprep.subr.mxu0 0.0
    %943 = vmatpush1.msra.mxu0 0.0
    %944 = vmatprep.subr.mxu0 0.0
    %945 = vmatpush1.msra.mxu0 0.0
    %946 = vmatprep.subr.mxu0 0.0
    %947 = vmatpush1.msra.mxu0 0.0
    %948 = vmatprep.subr.mxu0 0.0
    %949 = vmatpush1.msra.mxu0 0.0
    %950 = vmatprep.subr.mxu0 0.0
    %951 = vmatpush1.msra.mxu0 0.0
    %952 = vmatprep.subr.mxu0 0.0
    %953 = vmatpush1.msra.mxu0 0.0
    %954 = vmatprep.subr.mxu0 0.0
    %955 = vmatpush1.msra.mxu0 0.0
    %956 = vmatprep.subr.mxu0 0.0
    %957 = vmatpush1.msra.mxu0 0.0
    %958 = vmatprep.subr.mxu0 0.0
    %959 = vmatpush1.msra.mxu0 0.0
    %960 = vmatprep.subr.mxu0 0.0
    %961 = vmatpush1.msra.mxu0 0.0
    %962 = vmatprep.subr.mxu0 0.0
    %963 = vmatpush1.msra.mxu0 0.0
    %964 = vmatprep.subr.mxu0 0.0
    %965 = vmatpush1.msra.mxu0 0.0
    %966 = vmatprep.mubr.f32.mxu0 0.0
    %967 = vmatmul.mubr.f32.gmra.mrb[0].mxu0 %v900
    %v968 = vpop.f32.mrb[0].mxu0
    %v969 = vadd.f32 %v897, %v968
    %v970 = vpop.f32.mrb[0].mxu0
    %971 = vdwg.mxu0
    %v972 = vsel %vm113, %v969, -inf
    %973 = vmax.xlane.f32.xlu0 %v972
    %v974 = vpop.xlane.xlu0 %973
    %v975 = vsub.f32 %v969, %v974
    %v976 = vmul.f32 %v975, 1.442695
    %v977 = vpow.pop %v976
    %v978 = vsel %vm113, %v977, 0.0
    %979 = vadd.xlane.f32.xlu0 %v978
    %v980 = vpop.xlane.xlu0 %979
    %v981 = vrcp.pop %v980
    %v982 = vmul.f32 %v977, %v981
    %983 = vst.msk [vmem:[#allocation4] sm:$0xff] %vm113, %v982
    %v984 = vld [vmem:[%s8] sm:$0x1]
    %v986 = vlaneseq
    %v987 = vshrl.u32 %v986, 7
    %v988 = vsub.s32 0, %v987
    %v989 = vrot.slane %v984, %v988
    %v991 = vmul.f32 %v887, %v989
    %v992 = vsel %vm885, %v991, 0.0
    %993 = vadd.xlane.f32.xlu0 %v992
    %v994 = vpop.xlane.xlu0 %993
    %s995 = sld [smem:[#allocation3]]
    %v996 = vstv %s995
    %v997 = vadd.f32 %v994, %v996
    %vm998 = vcmask 7168
    %999 = vst.msk [vmem:[%s11] sm:$0xff] %vm998, %v997
    // Predicated region
    $region49: #{tpu_custom_call.1} parent=1 // pred_check
      _
    $region50: #{tpu_custom_call.1} parent=1 // pred_check_branch
      %1001 = sbr.rel (0) target = $region52
    $region51: #{tpu_custom_call.1} parent=1 // pred_region
      %s1003 = ssub.s32 128, 128
      %1004 = vsyncadd [#allocation5], %s1003
      %s1006 = sshll.u32 [#allocation4], 4
      %s1007 = int_to_ptr.vmem [resolvable:$true] %s1006
      %1009 = dma.vmem_to_hbm [thread:$0]  %s1007, 128, %s10, [#allocation5]
    $region52: #{tpu_custom_call.1} parent=1 // pred_fallthru
      _
    // Predicated region
    $region53: #{tpu_custom_call.1} parent=1 // pred_check
      _
    $region54: #{tpu_custom_call.1} parent=1 // pred_check_branch
      %1011 = sbr.rel (0) target = $region56
    $region55: #{tpu_custom_call.1} parent=1 // pred_region
      _
    $region56: #{tpu_custom_call.1} parent=1 // pred_fallthru
      _
    // Predicated region
    $region57: #{tpu_custom_call.1} parent=1 // pred_check
      _
    $region58: #{tpu_custom_call.1} parent=1 // pred_check_branch
      %1013 = sbr.rel (0) target = $region60
    $region59: #{tpu_custom_call.1} parent=1 // pred_region
      %s1015 = ssub.s32 128, 128
      %1016 = vsyncadd [#allocation7], %s1015
      %s1018 = sshll.u32 [#allocation6], 4
      %s1019 = int_to_ptr.vmem [resolvable:$true] %s1018
      %1021 = dma.vmem_to_hbm [thread:$0]  %s1019, 128, %s12, [#allocation7]
    $region60: #{tpu_custom_call.1} parent=1 // pred_fallthru
      _
    // Predicated region
    $region61: #{tpu_custom_call.1} parent=1 // pred_check
      _
    $region62: #{tpu_custom_call.1} parent=1 // pred_check_branch
      %1023 = sbr.rel (0) target = $region64
    $region63: #{tpu_custom_call.1} parent=1 // pred_region
      %1024 = dma.done [#allocation5], 128
    $region64: #{tpu_custom_call.1} parent=1 // pred_fallthru
      _
    // Predicated region
    $region65: #{tpu_custom_call.1} parent=1 // pred_check
      _
    $region66: #{tpu_custom_call.1} parent=1 // pred_check_branch
      %1026 = sbr.rel (0) target = $region68
    $region67: #{tpu_custom_call.1} parent=1 // pred_region
      _
    $region68: #{tpu_custom_call.1} parent=1 // pred_fallthru
      _
    // Predicated region
    $region69: #{tpu_custom_call.1} parent=1 // pred_check
      _
    $region70: #{tpu_custom_call.1} parent=1 // pred_check_branch
      %1028 = sbr.rel (0) target = $region72
    $region71: #{tpu_custom_call.1} parent=1 // pred_region
      %1029 = dma.done [#allocation7], 128
    $region72: #{tpu_custom_call.1} parent=1 // pred_fallthru
      _
    %1030 = vsyncpa [#allocation5], 1
    %1031 = vsyncpa [#allocation7], 1

</llo_original>
